<compile_context>
chip_gen: v7x
topology: tpu7x:2x2x1
jax: 0.10.0
libtpu: 0.0.40
codegen_flags: <defaults>
</compile_context>

<pallas_src>
import functools

import jax
import jax.numpy as jnp
from jax.experimental import pallas as pl
from jax.experimental.pallas import tpu as pltpu

LN_EPS = 1e-5  # torch.nn.LayerNorm default


def _round_up(n: int, m: int) -> int:
    return (n + m - 1) // m * m


def modality_encoder_kernel(x_ref, w1_ref, b1_ref, g_ref, be_ref, w2_ref, b2_ref,
                            o_ref, *, hidden_dim: int):
    """Fused Linear -> LayerNorm -> ReLU -> Linear on one row tile.

    All feature dims are padded to multiples of 128 in the wrapper; the padded
    hidden columns of `h` are exactly zero (zero-padded x / w1 / b1), so the
    single-pass sums below are exact when divided by the *real* hidden_dim, and
    zero-padded gamma kills the padded hidden lanes before the second matmul.
    """
    # Linear 1 on the MXU (bf16 operands, f32 accumulation).
    h = jnp.dot(x_ref[...], w1_ref[...], preferred_element_type=jnp.float32)
    h = h + b1_ref[...]

    # LayerNorm (f32): fused one-pass statistics — the two reductions are
    # independent so the XLUs can overlap them.
    inv_h = jnp.float32(1.0 / hidden_dim)
    s1 = jnp.sum(h, axis=-1, keepdims=True)
    s2 = jnp.sum(h * h, axis=-1, keepdims=True)
    mean = s1 * inv_h
    var = s2 * inv_h - mean * mean
    h_norm = (h - mean) * jax.lax.rsqrt(var + LN_EPS)
    h_norm = h_norm * g_ref[...] + be_ref[...]

    # ReLU, then Linear 2 on the MXU.
    h_act = jnp.maximum(h_norm, 0.0).astype(w2_ref.dtype)
    out = jnp.dot(h_act, w2_ref[...], preferred_element_type=jnp.float32)
    out = out + b2_ref[...]
    o_ref[...] = out.astype(o_ref.dtype)


def modality_encoder(x, w1, b1, gamma, beta, w2, b2, *,
                     tm=None, mxu_dtype=jnp.bfloat16, out_dtype=None):
    """x: [B, D_in]. w1: [D_in, H] (pre-transposed), w2: [H, D_out] (pre-transposed).
    b1/gamma/beta: [H] (or [1, H]), b2: [D_out] (or [1, D_out])."""
    B, D_in = x.shape
    Dw, H = w1.shape
    Hw, D_out = w2.shape
    assert Dw == D_in and Hw == H and w2.shape == (H, D_out)
    out_dtype = x.dtype if out_dtype is None else out_dtype

    # ---- lane-dense padding of the feature dims (multiples of 128) ----
    D_in_p = _round_up(D_in, 128)
    H_p = _round_up(H, 128)
    D_out_p = _round_up(D_out, 128)

    # ---- row tile / batch padding ----
    if tm is None:
        b8 = _round_up(B, 8)
        if b8 >= 512:
            tm = 256          # full MXU M-tile, grid still >= 2 steps
        elif b8 >= 256:
            tm = 128          # keep >= 2 grid steps for v7x megacore
        else:
            tm = b8           # small batch: single tile
    B_p = _round_up(B, tm)

    f32 = jnp.float32

    def pad2(a, rows, cols, dtype):
        a = jnp.asarray(a, dtype=dtype).reshape(-1, a.shape[-1]) if a.ndim == 1 else jnp.asarray(a, dtype=dtype)
        if a.ndim == 1:
            a = a.reshape(1, -1)
        return jnp.pad(a, ((0, rows - a.shape[0]), (0, cols - a.shape[1])))

    x_p = pad2(x, B_p, D_in_p, mxu_dtype)
    w1_p = pad2(w1, D_in_p, H_p, mxu_dtype)
    w2_p = pad2(w2, H_p, D_out_p, mxu_dtype)
    b1_p = pad2(jnp.reshape(b1, (1, H)), 1, H_p, f32)
    g_p = pad2(jnp.reshape(gamma, (1, H)), 1, H_p, f32)   # zero pad -> padded hidden lanes -> 0
    be_p = pad2(jnp.reshape(beta, (1, H)), 1, H_p, f32)
    b2_p = pad2(jnp.reshape(b2, (1, D_out)), 1, D_out_p, f32)

    grid = (B_p // tm,)

    # ---- VMEM budget (double-buffered tiles + resident weights + f32 temporaries) ----
    in_bytes = jnp.dtype(mxu_dtype).itemsize
    out_bytes = jnp.dtype(out_dtype).itemsize
    footprint = (
        2 * tm * D_in_p * in_bytes                       # x tile (double-buffered)
        + 2 * tm * D_out_p * out_bytes                   # out tile (double-buffered)
        + 2 * (D_in_p * H_p + H_p * D_out_p) * in_bytes  # weights (constant index_map)
        + 2 * (3 * H_p + D_out_p) * 4                    # biases / LN params (f32)
        + 4 * tm * H_p * 4                               # in-body f32 temporaries
    )
    vmem_limit = int(min(64 * 1024 * 1024, max(32 * 1024 * 1024, 2 * footprint)))

    kernel = functools.partial(modality_encoder_kernel, hidden_dim=H)

    out_p = pl.pallas_call(
        kernel,
        out_shape=jax.ShapeDtypeStruct((B_p, D_out_p), out_dtype),
        grid_spec=pltpu.PrefetchScalarGridSpec(
            num_scalar_prefetch=0,
            grid=grid,
            in_specs=[
                pl.BlockSpec((tm, D_in_p), lambda i: (i, 0)),   # x rows
                pl.BlockSpec((D_in_p, H_p), lambda i: (0, 0)),  # w1 (full, constant index)
                pl.BlockSpec((1, H_p), lambda i: (0, 0)),       # b1
                pl.BlockSpec((1, H_p), lambda i: (0, 0)),       # ln gamma
                pl.BlockSpec((1, H_p), lambda i: (0, 0)),       # ln beta
                pl.BlockSpec((H_p, D_out_p), lambda i: (0, 0)), # w2 (full, constant index)
                pl.BlockSpec((1, D_out_p), lambda i: (0, 0)),   # b2
            ],
            out_specs=pl.BlockSpec((tm, D_out_p), lambda i: (i, 0)),
        ),
        compiler_params=pltpu.CompilerParams(
            dimension_semantics=("parallel",),
            vmem_limit_bytes=vmem_limit,
        ),
    )(x_p, w1_p, b1_p, g_p, be_p, w2_p, b2_p)

    return out_p[:B, :D_out]


def reference(x, w1, b1, gamma, beta, w2, b2):
    h = x @ w1 + b1
    mean = jnp.mean(h, axis=-1, keepdims=True)
    var = jnp.mean((h - mean) ** 2, axis=-1, keepdims=True)
    h = (h - mean) / jnp.sqrt(var + LN_EPS)
    h = h * gamma + beta
    h = jnp.maximum(h, 0.0)
    return h @ w2 + b2


def _make_params(key, D_in, H, D_out):
    k1, kb1, k2, kb2 = jax.random.split(key, 4)
    w1 = jax.random.uniform(k1, (D_in, H), minval=-1.0, maxval=1.0, dtype=jnp.float32) / jnp.sqrt(D_in)
    b1 = jax.random.uniform(kb1, (H,), minval=-1.0, maxval=1.0, dtype=jnp.float32) / jnp.sqrt(D_in)
    gamma = jnp.ones((H,), dtype=jnp.float32)
    beta = jnp.zeros((H,), dtype=jnp.float32)
    w2 = jax.random.uniform(k2, (H, D_out), minval=-1.0, maxval=1.0, dtype=jnp.float32) / jnp.sqrt(H)
    b2 = jax.random.uniform(kb2, (D_out,), minval=-1.0, maxval=1.0, dtype=jnp.float32) / jnp.sqrt(H)
    return w1, b1, gamma, beta, w2, b2


if __name__ == "__main__":
    key = jax.random.PRNGKey(0)
    kx1, kp1, kx2, kp2 = jax.random.split(key, 4)

    # ---- Case 1: toy module shapes (batch=8, input=16, hidden=32, output=16),
    #              f32 MXU path, tight tolerance.
    B, D_in, H, D_out = 8, 16, 32, 16
    x = jax.random.normal(kx1, (B, D_in), dtype=jnp.float32)
    params = _make_params(kp1, D_in, H, D_out)

    out_f32 = jax.block_until_ready(
        modality_encoder(x, *params, mxu_dtype=jnp.float32))
    ref = reference(x, *params)
    assert out_f32.shape == (B, D_out)
    assert jnp.allclose(out_f32, ref, atol=1e-4, rtol=1e-4), "f32 path mismatch"

    # ---- Case 2: same shapes, bf16 MXU fast path (v6e/v7x), loose tolerance.
    out_bf16 = jax.block_until_ready(
        modality_encoder(x, *params, mxu_dtype=jnp.bfloat16))
    assert out_bf16.shape == (B, D_out)
    assert jnp.allclose(out_bf16, ref, atol=5e-2, rtol=5e-2), "bf16 path mismatch"

    # ---- Case 3: ragged batch + non-128 features to exercise padding and a
    #              multi-step (megacore-shardable) grid.
    B2, D_in2, H2, D_out2 = 300, 48, 96, 24
    x2 = jax.random.normal(kx2, (B2, D_in2), dtype=jnp.float32)
    params2 = _make_params(kp2, D_in2, H2, D_out2)

    out2 = jax.block_until_ready(
        modality_encoder(x2, *params2, mxu_dtype=jnp.bfloat16))
    ref2 = reference(x2, *params2)
    assert out2.shape == (B2, D_out2)
    assert jnp.allclose(out2, ref2, atol=5e-2, rtol=5e-2), "padded/bf16 path mismatch"

    print("KERNEL_OK")
</pallas_src>

<mosaic_0001>
module attributes {stable_mosaic.version = 11 : i64} {
  func.func @modality_encoder_kernel(%arg0: i32, %arg1: memref<8x128xf32, #tpu.memory_space<vmem>>, %arg2: memref<128x128xf32, #tpu.memory_space<vmem>>, %arg3: memref<1x128xf32, #tpu.memory_space<vmem>>, %arg4: memref<1x128xf32, #tpu.memory_space<vmem>>, %arg5: memref<1x128xf32, #tpu.memory_space<vmem>>, %arg6: memref<128x128xf32, #tpu.memory_space<vmem>>, %arg7: memref<1x128xf32, #tpu.memory_space<vmem>>, %arg8: memref<8x128xf32, #tpu.memory_space<vmem>>) attributes {dimension_semantics = [#tpu.dimension_semantics<parallel>], iteration_bounds = array<i64: 1>, scalar_prefetch = 0 : i64, scratch_operands = 0 : i64, tpu.core_type = #tpu.core_type<tc>, window_params = [{transform_indices = @transform_0, window_bounds = array<i64: 8, 128>}, {pipeline_mode = #tpu.pipeline_mode<synchronous>, transform_indices = @transform_1, window_bounds = array<i64: 128, 128>}, {pipeline_mode = #tpu.pipeline_mode<synchronous>, transform_indices = @transform_2, window_bounds = array<i64: 1, 128>}, {pipeline_mode = #tpu.pipeline_mode<synchronous>, transform_indices = @transform_3, window_bounds = array<i64: 1, 128>}, {pipeline_mode = #tpu.pipeline_mode<synchronous>, transform_indices = @transform_4, window_bounds = array<i64: 1, 128>}, {pipeline_mode = #tpu.pipeline_mode<synchronous>, transform_indices = @transform_5, window_bounds = array<i64: 128, 128>}, {pipeline_mode = #tpu.pipeline_mode<synchronous>, transform_indices = @transform_6, window_bounds = array<i64: 1, 128>}, {transform_indices = @transform_7, window_bounds = array<i64: 8, 128>}]} {
    %c0 = arith.constant 0 : index
    %c0_0 = arith.constant 0 : index
    %0 = vector.load %arg1[%c0, %c0_0] : memref<8x128xf32, #tpu.memory_space<vmem>>, vector<8x128xf32>
    %c0_1 = arith.constant 0 : index
    %c0_2 = arith.constant 0 : index
    %1 = vector.load %arg2[%c0_1, %c0_2] : memref<128x128xf32, #tpu.memory_space<vmem>>, vector<128x128xf32>
    %cst = arith.constant dense<0.000000e+00> : vector<8x128xf32>
    %2 = tpu.matmul %0, %1, %cst {dimension_numbers = #tpu.dot_dimension_numbers<[1], [0], [0], [1], [0, 0, 1, 1], [], []>} : vector<8x128xf32>, vector<128x128xf32>, vector<8x128xf32> -> vector<8x128xf32>
    %c0_3 = arith.constant 0 : index
    %c0_4 = arith.constant 0 : index
    %3 = vector.load %arg3[%c0_3, %c0_4] : memref<1x128xf32, #tpu.memory_space<vmem>>, vector<1x128xf32>
    %4 = vector.broadcast %3 : vector<1x128xf32> to vector<8x128xf32>
    %5 = arith.addf %2, %4 : vector<8x128xf32>
    %cst_5 = arith.constant dense<0.000000e+00> : vector<8xf32>
    %6 = vector.multi_reduction <add>, %5, %cst_5 [1] : vector<8x128xf32> to vector<8xf32>
    %7 = vector.shape_cast %6 : vector<8xf32> to vector<8x1xf32>
    %8 = arith.mulf %5, %5 : vector<8x128xf32>
    %cst_6 = arith.constant dense<0.000000e+00> : vector<8xf32>
    %9 = vector.multi_reduction <add>, %8, %cst_6 [1] : vector<8x128xf32> to vector<8xf32>
    %10 = vector.shape_cast %9 : vector<8xf32> to vector<8x1xf32>
    %cst_7 = arith.constant 3.125000e-02 : f32
    %11 = vector.broadcast %cst_7 : f32 to vector<8x1xf32>
    %12 = arith.mulf %7, %11 : vector<8x1xf32>
    %cst_8 = arith.constant 3.125000e-02 : f32
    %13 = vector.broadcast %cst_8 : f32 to vector<8x1xf32>
    %14 = arith.mulf %10, %13 : vector<8x1xf32>
    %15 = arith.mulf %12, %12 : vector<8x1xf32>
    %16 = arith.subf %14, %15 : vector<8x1xf32>
    %17 = vector.broadcast %12 : vector<8x1xf32> to vector<8x128xf32>
    %18 = arith.subf %5, %17 : vector<8x128xf32>
    %cst_9 = arith.constant 9.99999974E-6 : f32
    %19 = vector.broadcast %cst_9 : f32 to vector<8x1xf32>
    %20 = arith.addf %16, %19 : vector<8x1xf32>
    %21 = math.rsqrt %20 : vector<8x1xf32>
    %22 = vector.broadcast %21 : vector<8x1xf32> to vector<8x128xf32>
    %23 = arith.mulf %18, %22 : vector<8x128xf32>
    %c0_10 = arith.constant 0 : index
    %c0_11 = arith.constant 0 : index
    %24 = vector.load %arg4[%c0_10, %c0_11] : memref<1x128xf32, #tpu.memory_space<vmem>>, vector<1x128xf32>
    %25 = vector.broadcast %24 : vector<1x128xf32> to vector<8x128xf32>
    %26 = arith.mulf %23, %25 : vector<8x128xf32>
    %c0_12 = arith.constant 0 : index
    %c0_13 = arith.constant 0 : index
    %27 = vector.load %arg5[%c0_12, %c0_13] : memref<1x128xf32, #tpu.memory_space<vmem>>, vector<1x128xf32>
    %28 = vector.broadcast %27 : vector<1x128xf32> to vector<8x128xf32>
    %29 = arith.addf %26, %28 : vector<8x128xf32>
    %cst_14 = arith.constant 0.000000e+00 : f32
    %30 = vector.broadcast %cst_14 : f32 to vector<8x128xf32>
    %31 = arith.maximumf %29, %30 : vector<8x128xf32>
    %c0_15 = arith.constant 0 : index
    %c0_16 = arith.constant 0 : index
    %32 = vector.load %arg6[%c0_15, %c0_16] : memref<128x128xf32, #tpu.memory_space<vmem>>, vector<128x128xf32>
    %cst_17 = arith.constant dense<0.000000e+00> : vector<8x128xf32>
    %33 = tpu.matmul %31, %32, %cst_17 {dimension_numbers = #tpu.dot_dimension_numbers<[1], [0], [0], [1], [0, 0, 1, 1], [], []>} : vector<8x128xf32>, vector<128x128xf32>, vector<8x128xf32> -> vector<8x128xf32>
    %c0_18 = arith.constant 0 : index
    %c0_19 = arith.constant 0 : index
    %34 = vector.load %arg7[%c0_18, %c0_19] : memref<1x128xf32, #tpu.memory_space<vmem>>, vector<1x128xf32>
    %35 = vector.broadcast %34 : vector<1x128xf32> to vector<8x128xf32>
    %36 = arith.addf %33, %35 : vector<8x128xf32>
    %c0_20 = arith.constant 0 : index
    %c0_21 = arith.constant 0 : index
    %37 = vector.load %arg8[%c0_20, %c0_21] : memref<8x128xf32, #tpu.memory_space<vmem>>, vector<8x128xf32>
    tpu.vector_store %arg8[%c0_20, %c0_21], %36 {strides = array<i32>} : memref<8x128xf32, #tpu.memory_space<vmem>>, vector<8x128xf32>,
    return
  }
  func.func @transform_0(%arg0: i32) -> (i32, i32) {
    %c0_i32 = arith.constant 0 : i32
    %c0_i32_0 = arith.constant 0 : i32
    return %arg0, %c0_i32 : i32, i32
  }
  func.func @transform_1(%arg0: i32) -> (i32, i32) {
    %c0_i32 = arith.constant 0 : i32
    %c0_i32_0 = arith.constant 0 : i32
    %c0_i32_1 = arith.constant 0 : i32
    return %c0_i32, %c0_i32_0 : i32, i32
  }
  func.func @transform_2(%arg0: i32) -> (i32, i32) {
    %c0_i32 = arith.constant 0 : i32
    %c0_i32_0 = arith.constant 0 : i32
    %c0_i32_1 = arith.constant 0 : i32
    return %c0_i32, %c0_i32_0 : i32, i32
  }
  func.func @transform_3(%arg0: i32) -> (i32, i32) {
    %c0_i32 = arith.constant 0 : i32
    %c0_i32_0 = arith.constant 0 : i32
    %c0_i32_1 = arith.constant 0 : i32
    return %c0_i32, %c0_i32_0 : i32, i32
  }
  func.func @transform_4(%arg0: i32) -> (i32, i32) {
    %c0_i32 = arith.constant 0 : i32
    %c0_i32_0 = arith.constant 0 : i32
    %c0_i32_1 = arith.constant 0 : i32
    return %c0_i32, %c0_i32_0 : i32, i32
  }
  func.func @transform_5(%arg0: i32) -> (i32, i32) {
    %c0_i32 = arith.constant 0 : i32
    %c0_i32_0 = arith.constant 0 : i32
    %c0_i32_1 = arith.constant 0 : i32
    return %c0_i32, %c0_i32_0 : i32, i32
  }
  func.func @transform_6(%arg0: i32) -> (i32, i32) {
    %c0_i32 = arith.constant 0 : i32
    %c0_i32_0 = arith.constant 0 : i32
    %c0_i32_1 = arith.constant 0 : i32
    return %c0_i32, %c0_i32_0 : i32, i32
  }
  func.func @transform_7(%arg0: i32) -> (i32, i32) {
    %c0_i32 = arith.constant 0 : i32
    %c0_i32_0 = arith.constant 0 : i32
    return %arg0, %c0_i32 : i32, i32
  }
}

</mosaic_0001>

<llo_original>
// kernel: tpu_custom_call.1
$region0: #{tpu_custom_call.1}
  #allocation0 [shape = 'u32[]', space=smem, size = 0x4, offset = 0x4, fixed_abs, tag = 'smem constant byte address 0x4 - core index']
  #allocation1 [shape = 'u32[144,128]{1,0:T(1,128)}', space=vmem, size = 0x12000, scoped, tag = 'internal scratch']
  %s0 = inlined_call_operand.hbm [shape: f32[8,128], index: 0, kind: input, shape index: {}]
  %s1 = inlined_call_operand.hbm [shape: f32[128,128], index: 1, kind: input, shape index: {}]
  %s2 = inlined_call_operand.vmem [shape: f32[1,128], index: 2, kind: input, shape index: {}]
  %s3 = inlined_call_operand.vmem [shape: f32[1,128], index: 3, kind: input, shape index: {}]
  %s4 = inlined_call_operand.vmem [shape: f32[1,128], index: 4, kind: input, shape index: {}]
  %s5 = inlined_call_operand.hbm [shape: f32[128,128], index: 5, kind: input, shape index: {}]
  %s6 = inlined_call_operand.vmem [shape: f32[1,128], index: 6, kind: input, shape index: {}]
  %s7 = inlined_call_operand.hbm [shape: f32[8,128], index: 7, kind: output, shape index: {}]
  %s8 = sld [smem:[#allocation0]]
  $region50: #{tpu_custom_call.1} parent=0
    _
  %s10 = ssub.s32 1, %s8
  %s11 = scalar_select 0, %s10, %s8
  $region1: #{tpu_custom_call.1} parent=0
    #allocation2 [shape = 'u8[4096]{0}', space=vmem, size = 0x1000, scoped, tag = 'input window, operand 0, single buffered']
    #allocation3 [shape = 's32[1]{0}', space=sflag, size = 0x4, scoped, tag = 'scoped memory for tpu_custom_call.1']
    #allocation4 [shape = 's32[1]{0}', space=sflag, size = 0x4, scoped, tag = 'scoped memory for tpu_custom_call.1']
    #allocation5 [shape = 'u8[65536]{0}', space=vmem, size = 0x10000, scoped, tag = 'input window, operand 1, single buffered']
    #allocation6 [shape = 's32[1]{0}', space=sflag, size = 0x4, scoped, tag = 'scoped memory for tpu_custom_call.1']
    #allocation7 [shape = 'u8[65536]{0}', space=vmem, size = 0x10000, scoped, tag = 'input window, operand 5, single buffered']
    #allocation8 [shape = 'u8[4096]{0}', space=vmem, size = 0x1000, scoped, tag = 'output window, operand 0, single buffered']
    %12 = vsyncpa [#allocation3], 0
    %13 = vsyncpa [#allocation6], 0
    %14 = vsyncpa [#allocation4], 0
    // Predicated region
    $region2: #{tpu_custom_call.1} parent=1 // pred_check
      _
    $region3: #{tpu_custom_call.1} parent=1 // pred_check_branch
      %16 = sbr.rel (0) target = $region5
    $region4: #{tpu_custom_call.1} parent=1 // pred_region
      %s18 = ssub.s32 128, 128
      %19 = vsyncadd [#allocation3], %s18
      %s21 = sshll.u32 [#allocation2], 4
      %s22 = int_to_ptr.vmem [resolvable:$true] %s21
      %24 = dma.hbm_to_vmem [thread:$0]  %s0, 128, %s22, [#allocation3]
    $region5: #{tpu_custom_call.1} parent=1 // pred_fallthru
      _
    // Predicated region
    $region6: #{tpu_custom_call.1} parent=1 // pred_check
      _
    $region7: #{tpu_custom_call.1} parent=1 // pred_check_branch
      %26 = sbr.rel (0) target = $region9
    $region8: #{tpu_custom_call.1} parent=1 // pred_region
      %s28 = ssub.s32 2048, 2048
      %29 = vsyncadd [#allocation6], %s28
      %s30 = sshll.u32 [#allocation5], 4
      %s31 = int_to_ptr.vmem [resolvable:$true] %s30
      %36 = dma.hbm_to_vmem [thread:$0]  %s1, 2048, %s31, [#allocation6], 128, 128, 8
    $region9: #{tpu_custom_call.1} parent=1 // pred_fallthru
      _
    // Predicated region
    $region10: #{tpu_custom_call.1} parent=1 // pred_check
      _
    $region11: #{tpu_custom_call.1} parent=1 // pred_check_branch
      %38 = sbr.rel (0) target = $region13
    $region12: #{tpu_custom_call.1} parent=1 // pred_region
      _
    $region13: #{tpu_custom_call.1} parent=1 // pred_fallthru
      _
    // Predicated region
    $region14: #{tpu_custom_call.1} parent=1 // pred_check
      _
    $region15: #{tpu_custom_call.1} parent=1 // pred_check_branch
      %40 = sbr.rel (0) target = $region17
    $region16: #{tpu_custom_call.1} parent=1 // pred_region
      _
    $region17: #{tpu_custom_call.1} parent=1 // pred_fallthru
      _
    // Predicated region
    $region18: #{tpu_custom_call.1} parent=1 // pred_check
      _
    $region19: #{tpu_custom_call.1} parent=1 // pred_check_branch
      %42 = sbr.rel (0) target = $region21
    $region20: #{tpu_custom_call.1} parent=1 // pred_region
      _
    $region21: #{tpu_custom_call.1} parent=1 // pred_fallthru
      _
    // Predicated region
    $region22: #{tpu_custom_call.1} parent=1 // pred_check
      _
    $region23: #{tpu_custom_call.1} parent=1 // pred_check_branch
      %44 = sbr.rel (0) target = $region25
    $region24: #{tpu_custom_call.1} parent=1 // pred_region
      %s46 = ssub.s32 2048, 2048
      %47 = vsyncadd [#allocation6], %s46
      %s48 = sshll.u32 [#allocation7], 4
      %s49 = int_to_ptr.vmem [resolvable:$true] %s48
      %54 = dma.hbm_to_vmem [thread:$0]  %s5, 2048, %s49, [#allocation6], 128, 128, 8
    $region25: #{tpu_custom_call.1} parent=1 // pred_fallthru
      _
    // Predicated region
    $region26: #{tpu_custom_call.1} parent=1 // pred_check
      _
    $region27: #{tpu_custom_call.1} parent=1 // pred_check_branch
      %56 = sbr.rel (0) target = $region29
    $region28: #{tpu_custom_call.1} parent=1 // pred_region
      _
    $region29: #{tpu_custom_call.1} parent=1 // pred_fallthru
      _
    // Predicated region
    $region30: #{tpu_custom_call.1} parent=1 // pred_check
      _
    $region31: #{tpu_custom_call.1} parent=1 // pred_check_branch
      %58 = sbr.rel (0) target = $region33
    $region32: #{tpu_custom_call.1} parent=1 // pred_region
      %59 = dma.done [#allocation3], 128
    $region33: #{tpu_custom_call.1} parent=1 // pred_fallthru
      _
    // Predicated region
    $region34: #{tpu_custom_call.1} parent=1 // pred_check
      _
    $region35: #{tpu_custom_call.1} parent=1 // pred_check_branch
      %61 = sbr.rel (0) target = $region37
    $region36: #{tpu_custom_call.1} parent=1 // pred_region
      %62 = dma.done [#allocation6], 2048
    $region37: #{tpu_custom_call.1} parent=1 // pred_fallthru
      _
    // Predicated region
    $region38: #{tpu_custom_call.1} parent=1 // pred_check
      _
    $region39: #{tpu_custom_call.1} parent=1 // pred_check_branch
      %64 = sbr.rel (0) target = $region41
    $region40: #{tpu_custom_call.1} parent=1 // pred_region
      %65 = dma.done [#allocation6], 2048
    $region41: #{tpu_custom_call.1} parent=1 // pred_fallthru
      _
    %v66 = vld [vmem:[#allocation2] sm:$0xff]
    %v67 = vld [vmem:[#allocation5] sm:$0xff]
    %v68 = vld [vmem:[#allocation5 + $0x8] sm:$0xff]
    %v69 = vld [vmem:[#allocation5 + $0x10] sm:$0xff]
    %v70 = vld [vmem:[#allocation5 + $0x18] sm:$0xff]
    %v71 = vld [vmem:[#allocation5 + $0x20] sm:$0xff]
    %v72 = vld [vmem:[#allocation5 + $0x28] sm:$0xff]
    %v73 = vld [vmem:[#allocation5 + $0x30] sm:$0xff]
    %v74 = vld [vmem:[#allocation5 + $0x38] sm:$0xff]
    %v75 = vld [vmem:[#allocation5 + $0x40] sm:$0xff]
    %v76 = vld [vmem:[#allocation5 + $0x48] sm:$0xff]
    %v77 = vld [vmem:[#allocation5 + $0x50] sm:$0xff]
    %v78 = vld [vmem:[#allocation5 + $0x58] sm:$0xff]
    %v79 = vld [vmem:[#allocation5 + $0x60] sm:$0xff]
    %v80 = vld [vmem:[#allocation5 + $0x68] sm:$0xff]
    %v81 = vld [vmem:[#allocation5 + $0x70] sm:$0xff]
    %v82 = vld [vmem:[#allocation5 + $0x78] sm:$0xff]
    %v83 = vld [vmem:[%s2] sm:$0x1]
    %v85 = vlaneseq
    %v86 = vshrl.u32 %v85, 7
    %v87 = vsub.s32 0, %v86
    %v88 = vrot.slane %v83, %v87
    %90 = vmatprep.subr.mxu0 0.0
    %91 = vmatpush1.msra.mxu0 %v67
    %92 = vmatprep.subr.mxu0 0.0
    %93 = vmatpush1.msra.mxu0 %v68
    %94 = vmatprep.subr.mxu0 0.0
    %95 = vmatpush1.msra.mxu0 %v69
    %96 = vmatprep.subr.mxu0 0.0
    %97 = vmatpush1.msra.mxu0 %v70
    %98 = vmatprep.subr.mxu0 0.0
    %99 = vmatpush1.msra.mxu0 %v71
    %100 = vmatprep.subr.mxu0 0.0
    %101 = vmatpush1.msra.mxu0 %v72
    %102 = vmatprep.subr.mxu0 0.0
    %103 = vmatpush1.msra.mxu0 %v73
    %104 = vmatprep.subr.mxu0 0.0
    %105 = vmatpush1.msra.mxu0 %v74
    %106 = vmatprep.subr.mxu0 0.0
    %107 = vmatpush1.msra.mxu0 %v75
    %108 = vmatprep.subr.mxu0 0.0
    %109 = vmatpush1.msra.mxu0 %v76
    %110 = vmatprep.subr.mxu0 0.0
    %111 = vmatpush1.msra.mxu0 %v77
    %112 = vmatprep.subr.mxu0 0.0
    %113 = vmatpush1.msra.mxu0 %v78
    %114 = vmatprep.subr.mxu0 0.0
    %115 = vmatpush1.msra.mxu0 %v79
    %116 = vmatprep.subr.mxu0 0.0
    %117 = vmatpush1.msra.mxu0 %v80
    %118 = vmatprep.subr.mxu0 0.0
    %119 = vmatpush1.msra.mxu0 %v81
    %120 = vmatprep.subr.mxu0 0.0
    %121 = vmatpush1.msra.mxu0 %v82
    %122 = vmatprep.subr.mxu0 0.0
    %123 = vmatpush1.msra.mxu0 0.0
    %124 = vmatprep.subr.mxu0 0.0
    %125 = vmatpush1.msra.mxu0 0.0
    %126 = vmatprep.subr.mxu0 0.0
    %127 = vmatpush1.msra.mxu0 0.0
    %128 = vmatprep.subr.mxu0 0.0
    %129 = vmatpush1.msra.mxu0 0.0
    %130 = vmatprep.subr.mxu0 0.0
    %131 = vmatpush1.msra.mxu0 0.0
    %132 = vmatprep.subr.mxu0 0.0
    %133 = vmatpush1.msra.mxu0 0.0
    %134 = vmatprep.subr.mxu0 0.0
    %135 = vmatpush1.msra.mxu0 0.0
    %136 = vmatprep.subr.mxu0 0.0
    %137 = vmatpush1.msra.mxu0 0.0
    %138 = vmatprep.subr.mxu0 0.0
    %139 = vmatpush1.msra.mxu0 0.0
    %140 = vmatprep.subr.mxu0 0.0
    %141 = vmatpush1.msra.mxu0 0.0
    %142 = vmatprep.subr.mxu0 0.0
    %143 = vmatpush1.msra.mxu0 0.0
    %144 = vmatprep.subr.mxu0 0.0
    %145 = vmatpush1.msra.mxu0 0.0
    %146 = vmatprep.subr.mxu0 0.0
    %147 = vmatpush1.msra.mxu0 0.0
    %148 = vmatprep.subr.mxu0 0.0
    %149 = vmatpush1.msra.mxu0 0.0
    %150 = vmatprep.subr.mxu0 0.0
    %151 = vmatpush1.msra.mxu0 0.0
    %152 = vmatprep.subr.mxu0 0.0
    %153 = vmatpush1.msra.mxu0 0.0
    %154 = vmatprep.mubr.f32.mxu0 0.0
    %155 = vmatmul.mubr.f32.gmra.mrb[0].mxu0 %v66
    %v156 = vpop.f32.mrb[0].mxu0
    %v157 = vadd.f32 %v88, %v156
    %v158 = vpop.f32.mrb[0].mxu0
    %159 = vdwg.mxu0
    %160 = vadd.xlane.f32.xlu0 %v157
    %v161 = vpop.xlane.xlu0 %160
    %v162 = vmul.f32 %v157, %v157
    %163 = vadd.xlane.f32.xlu0 %v162
    %v164 = vpop.xlane.xlu0 %163
    %v165 = vmul.f32 %v161, 0.03125
    %v166 = vmul.f32 %v164, 0.03125
    %v167 = vmul.f32 %v165, %v165
    %v168 = vsub.f32 %v166, %v167
    %v169 = vsub.f32 %v157, %v165
    %v170 = vadd.f32 %v168, 1e-05
    %v171 = vrsqrt.pop %v170
    %v172 = vmul.f32 %v169, %v171
    %v173 = vld [vmem:[%s3] sm:$0x1]
    %v175 = vlaneseq
    %v176 = vshrl.u32 %v175, 7
    %v177 = vsub.s32 0, %v176
    %v178 = vrot.slane %v173, %v177
    %v180 = vmul.f32 %v172, %v178
    %v181 = vld [vmem:[%s4] sm:$0x1]
    %v183 = vlaneseq
    %v184 = vshrl.u32 %v183, 7
    %v185 = vsub.s32 0, %v184
    %v186 = vrot.slane %v181, %v185
    %v188 = vadd.f32 %v180, %v186
    %v189 = vmax.f32 %v188, 0.0
    %v190 = vld [vmem:[#allocation7] sm:$0xff]
    %v191 = vld [vmem:[#allocation7 + $0x8] sm:$0xff]
    %v192 = vld [vmem:[#allocation7 + $0x10] sm:$0xff]
    %v193 = vld [vmem:[#allocation7 + $0x18] sm:$0xff]
    %v194 = vld [vmem:[#allocation7 + $0x20] sm:$0xff]
    %v195 = vld [vmem:[#allocation7 + $0x28] sm:$0xff]
    %v196 = vld [vmem:[#allocation7 + $0x30] sm:$0xff]
    %v197 = vld [vmem:[#allocation7 + $0x38] sm:$0xff]
    %v198 = vld [vmem:[#allocation7 + $0x40] sm:$0xff]
    %v199 = vld [vmem:[#allocation7 + $0x48] sm:$0xff]
    %v200 = vld [vmem:[#allocation7 + $0x50] sm:$0xff]
    %v201 = vld [vmem:[#allocation7 + $0x58] sm:$0xff]
    %v202 = vld [vmem:[#allocation7 + $0x60] sm:$0xff]
    %v203 = vld [vmem:[#allocation7 + $0x68] sm:$0xff]
    %v204 = vld [vmem:[#allocation7 + $0x70] sm:$0xff]
    %v205 = vld [vmem:[#allocation7 + $0x78] sm:$0xff]
    %v206 = vld [vmem:[%s6] sm:$0x1]
    %v208 = vlaneseq
    %v209 = vshrl.u32 %v208, 7
    %v210 = vsub.s32 0, %v209
    %v211 = vrot.slane %v206, %v210
    %213 = vmatprep.subr.mxu0 0.0
    %214 = vmatpush1.msra.mxu0 %v190
    %215 = vmatprep.subr.mxu0 0.0
    %216 = vmatpush1.msra.mxu0 %v191
    %217 = vmatprep.subr.mxu0 0.0
    %218 = vmatpush1.msra.mxu0 %v192
    %219 = vmatprep.subr.mxu0 0.0
    %220 = vmatpush1.msra.mxu0 %v193
    %221 = vmatprep.subr.mxu0 0.0
    %222 = vmatpush1.msra.mxu0 %v194
    %223 = vmatprep.subr.mxu0 0.0
    %224 = vmatpush1.msra.mxu0 %v195
    %225 = vmatprep.subr.mxu0 0.0
    %226 = vmatpush1.msra.mxu0 %v196
    %227 = vmatprep.subr.mxu0 0.0
    %228 = vmatpush1.msra.mxu0 %v197
    %229 = vmatprep.subr.mxu0 0.0
    %230 = vmatpush1.msra.mxu0 %v198
    %231 = vmatprep.subr.mxu0 0.0
    %232 = vmatpush1.msra.mxu0 %v199
    %233 = vmatprep.subr.mxu0 0.0
    %234 = vmatpush1.msra.mxu0 %v200
    %235 = vmatprep.subr.mxu0 0.0
    %236 = vmatpush1.msra.mxu0 %v201
    %237 = vmatprep.subr.mxu0 0.0
    %238 = vmatpush1.msra.mxu0 %v202
    %239 = vmatprep.subr.mxu0 0.0
    %240 = vmatpush1.msra.mxu0 %v203
    %241 = vmatprep.subr.mxu0 0.0
    %242 = vmatpush1.msra.mxu0 %v204
    %243 = vmatprep.subr.mxu0 0.0
    %244 = vmatpush1.msra.mxu0 %v205
    %245 = vmatprep.subr.mxu0 0.0
    %246 = vmatpush1.msra.mxu0 0.0
    %247 = vmatprep.subr.mxu0 0.0
    %248 = vmatpush1.msra.mxu0 0.0
    %249 = vmatprep.subr.mxu0 0.0
    %250 = vmatpush1.msra.mxu0 0.0
    %251 = vmatprep.subr.mxu0 0.0
    %252 = vmatpush1.msra.mxu0 0.0
    %253 = vmatprep.subr.mxu0 0.0
    %254 = vmatpush1.msra.mxu0 0.0
    %255 = vmatprep.subr.mxu0 0.0
    %256 = vmatpush1.msra.mxu0 0.0
    %257 = vmatprep.subr.mxu0 0.0
    %258 = vmatpush1.msra.mxu0 0.0
    %259 = vmatprep.subr.mxu0 0.0
    %260 = vmatpush1.msra.mxu0 0.0
    %261 = vmatprep.subr.mxu0 0.0
    %262 = vmatpush1.msra.mxu0 0.0
    %263 = vmatprep.subr.mxu0 0.0
    %264 = vmatpush1.msra.mxu0 0.0
    %265 = vmatprep.subr.mxu0 0.0
    %266 = vmatpush1.msra.mxu0 0.0
    %267 = vmatprep.subr.mxu0 0.0
    %268 = vmatpush1.msra.mxu0 0.0
    %269 = vmatprep.subr.mxu0 0.0
    %270 = vmatpush1.msra.mxu0 0.0
    %271 = vmatprep.subr.mxu0 0.0
    %272 = vmatpush1.msra.mxu0 0.0
    %273 = vmatprep.subr.mxu0 0.0
    %274 = vmatpush1.msra.mxu0 0.0
    %275 = vmatprep.subr.mxu0 0.0
    %276 = vmatpush1.msra.mxu0 0.0
    %277 = vmatprep.mubr.f32.mxu0 0.0
    %278 = vmatmul.mubr.f32.gmra.mrb[0].mxu0 %v189
    %v279 = vpop.f32.mrb[0].mxu0
    %v280 = vadd.f32 %v211, %v279
    %v281 = vpop.f32.mrb[0].mxu0
    %282 = vdwg.mxu0
    %283 = vst [vmem:[#allocation8] sm:$0xff] %v280
    // Predicated region
    $region42: #{tpu_custom_call.1} parent=1 // pred_check
      _
    $region43: #{tpu_custom_call.1} parent=1 // pred_check_branch
      %285 = sbr.rel (0) target = $region45
    $region44: #{tpu_custom_call.1} parent=1 // pred_region
      %s287 = ssub.s32 128, 128
      %288 = vsyncadd [#allocation4], %s287
      %s290 = sshll.u32 [#allocation8], 4
      %s291 = int_to_ptr.vmem [resolvable:$true] %s290
      %293 = dma.vmem_to_hbm [thread:$0]  %s291, 128, %s7, [#allocation4]
    $region45: #{tpu_custom_call.1} parent=1 // pred_fallthru
      _
    // Predicated region
    $region46: #{tpu_custom_call.1} parent=1 // pred_check
      _
    $region47: #{tpu_custom_call.1} parent=1 // pred_check_branch
      %295 = sbr.rel (0) target = $region49
    $region48: #{tpu_custom_call.1} parent=1 // pred_region
      %296 = dma.done [#allocation4], 128
    $region49: #{tpu_custom_call.1} parent=1 // pred_fallthru
      _
    %297 = vsyncpa [#allocation3], 1
    %298 = vsyncpa [#allocation6], 1
    %299 = vsyncpa [#allocation4], 1

</llo_original>
